<compile_context>
chip_gen: v7x
topology: tpu7x:2x2x1
jax: 0.10.0
libtpu: 0.0.40
codegen_flags: <defaults>
</compile_context>

<pallas_src>
import functools
import math

import jax
import jax.numpy as jnp
from jax.experimental import pallas as pl
from jax.experimental.pallas import tpu as pltpu


# ---------------------------------------------------------------------------
# helpers
# ---------------------------------------------------------------------------
def _gelu_exact(x):
    # nn.GELU() default (erf formulation)
    return 0.5 * x * (1.0 + jax.lax.erf(x * (1.0 / math.sqrt(2.0))))


def _round_up(n, m):
    return ((n + m - 1) // m) * m


def _pad2d(x, rows, cols):
    pr = rows - x.shape[0]
    pc = cols - x.shape[1]
    if pr == 0 and pc == 0:
        return x
    return jnp.pad(x, ((0, pr), (0, pc)))


# ---------------------------------------------------------------------------
# Fused kernel: ProjectionHead(image) + ProjectionHead(spot) + CLIP loss
# ---------------------------------------------------------------------------
def _bleep_fused_kernel(x_img_ref, x_spot_ref,
                        wi1_ref, wi2_ref, ws1_ref, ws2_ref, vec_ref,
                        o_ref, i_scr, s_scr,
                        *, real_b, real_p, temperature, tile_b):
    step = pl.program_id(0)
    n_steps = pl.num_programs(0)
    B_pad, P_pad = i_scr.shape
    inv_p = 1.0 / real_p

    # lane mask for the real projection_dim columns (padded lanes are zero-weights)
    feat_mask = jax.lax.broadcasted_iota(jnp.int32, (tile_b, P_pad), 1) < real_p

    vec = vec_ref[...]  # (8, Pp) f32, rows: [b1, b2, gamma, beta] per head

    def proj_head(x_bf16, w1_bf16, w2_bf16, row0):
        b1 = vec[row0 + 0:row0 + 1, :]
        b2 = vec[row0 + 1:row0 + 2, :]
        gamma = vec[row0 + 2:row0 + 3, :]
        beta = vec[row0 + 3:row0 + 4, :]
        # bf16 MXU operands, f32 accumulation
        projected = jnp.dot(x_bf16, w1_bf16, preferred_element_type=jnp.float32) + b1
        h = _gelu_exact(projected)                         # exact erf GELU == nn.GELU()
        y = jnp.dot(h.astype(jnp.bfloat16), w2_bf16,
                    preferred_element_type=jnp.float32) + b2
        # TODO(synk): stochastic Dropout omitted (identity / eval-mode numerics).
        y = y + projected
        # padded lanes of y are exactly 0 (zero-padded weights/bias), so the raw
        # sum over P_pad equals the sum over the real P; divide by real P.
        mean = jnp.sum(y, axis=-1, keepdims=True) * inv_p
        centered = jnp.where(feat_mask, y - mean, 0.0)
        var = jnp.sum(centered * centered, axis=-1, keepdims=True) * inv_p
        norm = centered * jax.lax.rsqrt(var + 1e-5)        # LN eps = 1e-5
        # gamma/beta padded with 0 -> padded embedding lanes are exactly 0
        return norm * gamma + beta

    I_t = proj_head(x_img_ref[...], wi1_ref[...], wi2_ref[...], 0)   # (tile_b, Pp) f32
    S_t = proj_head(x_spot_ref[...], ws1_ref[...], ws2_ref[...], 4)

    r0 = pl.multiple_of(step * tile_b, tile_b)
    i_scr[pl.ds(r0, tile_b), :] = I_t.astype(jnp.bfloat16)
    s_scr[pl.ds(r0, tile_b), :] = S_t.astype(jnp.bfloat16)

    @pl.when(step == n_steps - 1)
    def _():
        I = i_scr[...]            # bf16 (Bp, Pp)
        S = s_scr[...]
        dn = (((1,), (1,)), ((), ()))   # A @ B.T without materializing a transpose

        row_ids = jax.lax.broadcasted_iota(jnp.int32, (B_pad, B_pad), 0)
        col_ids = jax.lax.broadcasted_iota(jnp.int32, (B_pad, B_pad), 1)
        valid = (row_ids < real_b) & (col_ids < real_b)
        neg_big = jnp.float32(-1e30)   # finite "minus infinity" (avoids 0 * inf NaNs)

        # --- targets first: similarity temporaries die before the CE temporaries ---
        images_sim = jax.lax.dot_general(I, I, dn, preferred_element_type=jnp.float32)
        spots_sim = jax.lax.dot_general(S, S, dn, preferred_element_type=jnp.float32)
        t = jnp.where(valid, (images_sim + spots_sim) * (0.5 * temperature), neg_big)
        t = t - jnp.max(t, axis=-1, keepdims=True)
        et = jnp.exp(t)
        targets = et * pl.reciprocal(jnp.sum(et, axis=-1, keepdims=True), approx=True)
        targets = jnp.where(valid, targets, 0.0)    # padded rows/cols contribute nothing

        # --- logits + cross-entropies ---
        logits = jax.lax.dot_general(S, I, dn, preferred_element_type=jnp.float32)
        # 1/temperature folded into the (already required) masking pass
        lg = jnp.where(valid, logits * (1.0 / temperature), neg_big)

        # spots_loss: cross-entropy over rows of logits (dim=-1)
        rmax = jnp.max(lg, axis=-1, keepdims=True)
        lse_r = jnp.log(jnp.sum(jnp.exp(lg - rmax), axis=-1, keepdims=True)) + rmax
        spots_loss = jnp.sum(-targets * (lg - lse_r), axis=-1, keepdims=True)   # (Bp, 1)

        # images_loss: cross-entropy over rows of logits.T == columns of logits,
        # computed with axis=0 reductions (no transpose materialized).
        cmax = jnp.max(lg, axis=0, keepdims=True)
        lse_c = jnp.log(jnp.sum(jnp.exp(lg - cmax), axis=0, keepdims=True)) + cmax
        images_loss = jnp.sum(-targets * (lg - lse_c), axis=0, keepdims=True)   # (1, Bp)

        # padded rows/cols have all-zero targets -> losses are exactly 0 there,
        # so plain sums are exact; mean over the real batch only.
        spots_sum = jnp.sum(spots_loss, axis=0, keepdims=True)    # (1, 1)
        images_sum = jnp.sum(images_loss, axis=1, keepdims=True)  # (1, 1)
        loss11 = (spots_sum + images_sum) * (0.5 / real_b)

        # lane-dense (unmasked) scalar store
        o_ref[...] = jnp.broadcast_to(loss11, o_ref.shape).astype(jnp.float32)


# ---------------------------------------------------------------------------
# BLEEP forward (phase='train'): _process_training_batch, fused single launch
# ---------------------------------------------------------------------------
def bleep_forward(img_features, spot_features, image_proj_params, spot_proj_params,
                  temperature):
    B, E_img = img_features.shape
    _, E_spot = spot_features.shape
    P = image_proj_params[0].shape[1]

    # Batch tiling: 256-aligned at production sizes (full 2x256x256 MXU occupancy
    # on v6e/v7x), 8-aligned at small/demo sizes. Features padded lane-dense.
    TILE_B = 256 if B >= 256 else _round_up(B, 8)
    Bp = _round_up(B, TILE_B)
    Eip = _round_up(E_img, 128)
    Esp = _round_up(E_spot, 128)
    Pp = _round_up(P, 128)
    n_tiles = Bp // TILE_B

    # bf16 MXU operands (halves the dominant feature-DMA traffic);
    # all LN / softmax / loss math stays f32 inside the kernel.
    x_img = _pad2d(img_features.astype(jnp.float32), Bp, Eip).astype(jnp.bfloat16)
    x_spot = _pad2d(spot_features.astype(jnp.float32), Bp, Esp).astype(jnp.bfloat16)

    wi1, bi1, wi2, bi2, gi, bti = image_proj_params
    ws1, bs1, ws2, bs2, gs, bts = spot_proj_params
    wi1p = _pad2d(wi1, Eip, Pp).astype(jnp.bfloat16)
    wi2p = _pad2d(wi2, Pp, Pp).astype(jnp.bfloat16)
    ws1p = _pad2d(ws1, Esp, Pp).astype(jnp.bfloat16)
    ws2p = _pad2d(ws2, Pp, Pp).astype(jnp.bfloat16)

    # pack the 8 tiny (1, P) vectors into one (8, Pp) f32 array -> single DMA
    vec = jnp.concatenate(
        [_pad2d(v, 1, Pp) for v in (bi1, bi2, gi, bti, bs1, bs2, gs, bts)],
        axis=0).astype(jnp.float32)

    # Explicit VMEM budget (v7x: 64 MiB physical / 32 MiB scoped default).
    est = (2 * 2 * TILE_B * (Eip + Esp) * 2                   # double-buffered bf16 feature tiles
           + 2 * (Eip * Pp + Esp * Pp + 2 * Pp * Pp) * 2      # bf16 weights (double-buffered)
           + 2 * 8 * Pp * 4                                   # packed vectors
           + 2 * Bp * Pp * 2                                  # persistent I/S scratch (bf16)
           + 6 * Bp * Bp * 4                                  # live BxB f32 loss temporaries
           + 2 * 128 * 4)                                     # output
    vmem_limit = int(min(max(2 * est, 16 << 20), 64 << 20))

    flops = 2 * Bp * Pp * (Eip + Esp + 2 * Pp) + 6 * Bp * Bp * Pp
    transcendentals = 2 * Bp * Pp + 2 * Bp * Bp
    bytes_accessed = int((x_img.size + x_spot.size + wi1p.size + wi2p.size
                          + ws1p.size + ws2p.size) * 2 + vec.size * 4 + 128 * 4)

    kernel = functools.partial(_bleep_fused_kernel, real_b=B, real_p=P,
                               temperature=float(temperature), tile_b=TILE_B)

    out = pl.pallas_call(
        kernel,
        out_shape=jax.ShapeDtypeStruct((1, 128), jnp.float32),
        grid_spec=pltpu.PrefetchScalarGridSpec(
            num_scalar_prefetch=0,
            grid=(n_tiles,),
            in_specs=[
                pl.BlockSpec((TILE_B, Eip), lambda i: (i, 0)),   # image feature tile
                pl.BlockSpec((TILE_B, Esp), lambda i: (i, 0)),   # spot feature tile
                pl.BlockSpec((Eip, Pp), lambda i: (0, 0)),       # image W1
                pl.BlockSpec((Pp, Pp), lambda i: (0, 0)),        # image W2
                pl.BlockSpec((Esp, Pp), lambda i: (0, 0)),       # spot W1
                pl.BlockSpec((Pp, Pp), lambda i: (0, 0)),        # spot W2
                pl.BlockSpec((8, Pp), lambda i: (0, 0)),         # packed b1/b2/gamma/beta
            ],
            out_specs=pl.BlockSpec((1, 128), lambda i: (0, 0)),
            scratch_shapes=[pltpu.VMEM((Bp, Pp), jnp.bfloat16),  # persistent I
                            pltpu.VMEM((Bp, Pp), jnp.bfloat16)], # persistent S
        ),
        compiler_params=pltpu.CompilerParams(
            # I/S scratch accumulation + final loss require a sequential grid axis.
            dimension_semantics=("arbitrary",),
            vmem_limit_bytes=vmem_limit),
        cost_estimate=pl.CostEstimate(flops=flops,
                                      transcendentals=transcendentals,
                                      bytes_accessed=bytes_accessed),
    )(x_img, x_spot, wi1p, wi2p, ws1p, ws2p, vec)
    return {"loss": out[0, 0]}


# ---------------------------------------------------------------------------
# Deterministic parameter init (PyTorch nn.Linear default: U(-1/sqrt(fan_in), ...))
# ---------------------------------------------------------------------------
def init_linear(key, fan_in, fan_out):
    k1, k2 = jax.random.split(key)
    bound = 1.0 / math.sqrt(fan_in)
    # weight pre-transposed to (in, out) so the kernel does x @ W
    w = jax.random.uniform(k1, (fan_in, fan_out), jnp.float32, -bound, bound)
    b = jax.random.uniform(k2, (1, fan_out), jnp.float32, -bound, bound)
    return w, b


def init_projection_head(key, embedding_dim, projection_dim):
    k1, k2 = jax.random.split(key)
    w1, b1 = init_linear(k1, embedding_dim, projection_dim)
    w2, b2 = init_linear(k2, projection_dim, projection_dim)
    gamma = jnp.ones((1, projection_dim), jnp.float32)
    beta = jnp.zeros((1, projection_dim), jnp.float32)
    return (w1, b1, w2, b2, gamma, beta)


if __name__ == "__main__":
    key = jax.random.PRNGKey(0)
    B = 8
    image_embedding = 64     # dim of image-encoder features
    spot_embedding = 32      # dim of spot expression features
    projection_dim = 32
    temperature = 1.0

    k_img, k_spot, k_ip, k_sp = jax.random.split(key, 4)
    img = jax.random.normal(k_img, (B, image_embedding), jnp.float32)
    label = jax.random.normal(k_spot, (B, spot_embedding), jnp.float32)

    image_proj_params = init_projection_head(k_ip, image_embedding, projection_dim)
    spot_proj_params = init_projection_head(k_sp, spot_embedding, projection_dim)

    out = bleep_forward(img, label, image_proj_params, spot_proj_params, temperature)
    jax.block_until_ready(out["loss"])
    print("KERNEL_OK")
</pallas_src>

<mosaic_0001>
module attributes {stable_mosaic.version = 11 : i64} {
  func.func @_bleep_fused_kernel(%arg0: i32, %arg1: memref<8x128xbf16, #tpu.memory_space<vmem>>, %arg2: memref<8x128xbf16, #tpu.memory_space<vmem>>, %arg3: memref<128x128xbf16, #tpu.memory_space<vmem>>, %arg4: memref<128x128xbf16, #tpu.memory_space<vmem>>, %arg5: memref<128x128xbf16, #tpu.memory_space<vmem>>, %arg6: memref<128x128xbf16, #tpu.memory_space<vmem>>, %arg7: memref<8x128xf32, #tpu.memory_space<vmem>>, %arg8: memref<1x128xf32, #tpu.memory_space<vmem>>, %arg9: memref<8x128xbf16, #tpu.memory_space<vmem>>, %arg10: memref<8x128xbf16, #tpu.memory_space<vmem>>) attributes {dimension_semantics = [#tpu.dimension_semantics<arbitrary>], iteration_bounds = array<i64: 1>, scalar_prefetch = 0 : i64, scratch_operands = 2 : i64, tpu.core_type = #tpu.core_type<tc>, window_params = [{transform_indices = @transform_0, window_bounds = array<i64: 8, 128>}, {transform_indices = @transform_1, window_bounds = array<i64: 8, 128>}, {pipeline_mode = #tpu.pipeline_mode<synchronous>, transform_indices = @transform_2, window_bounds = array<i64: 128, 128>}, {pipeline_mode = #tpu.pipeline_mode<synchronous>, transform_indices = @transform_3, window_bounds = array<i64: 128, 128>}, {pipeline_mode = #tpu.pipeline_mode<synchronous>, transform_indices = @transform_4, window_bounds = array<i64: 128, 128>}, {pipeline_mode = #tpu.pipeline_mode<synchronous>, transform_indices = @transform_5, window_bounds = array<i64: 128, 128>}, {pipeline_mode = #tpu.pipeline_mode<synchronous>, transform_indices = @transform_6, window_bounds = array<i64: 8, 128>}, {pipeline_mode = #tpu.pipeline_mode<synchronous>, transform_indices = @transform_7, window_bounds = array<i64: 1, 128>}]} {
    %0 = tpu.iota {dimensions = array<i32: 1>} : vector<8x128xi32>
    %c32_i32 = arith.constant 32 : i32
    %1 = vector.broadcast %c32_i32 : i32 to vector<8x128xi32>
    %2 = arith.cmpi slt, %0, %1 : vector<8x128xi32>
    %c0 = arith.constant 0 : index
    %c0_0 = arith.constant 0 : index
    %3 = vector.load %arg7[%c0, %c0_0] : memref<8x128xf32, #tpu.memory_space<vmem>>, vector<8x128xf32>
    %c0_1 = arith.constant 0 : index
    %c0_2 = arith.constant 0 : index
    %4 = vector.load %arg1[%c0_1, %c0_2] : memref<8x128xbf16, #tpu.memory_space<vmem>>, vector<8x128xbf16>
    %c0_3 = arith.constant 0 : index
    %c0_4 = arith.constant 0 : index
    %5 = vector.load %arg3[%c0_3, %c0_4] : memref<128x128xbf16, #tpu.memory_space<vmem>>, vector<128x128xbf16>
    %c0_5 = arith.constant 0 : index
    %c0_6 = arith.constant 0 : index
    %6 = vector.load %arg4[%c0_5, %c0_6] : memref<128x128xbf16, #tpu.memory_space<vmem>>, vector<128x128xbf16>
    %7 = vector.extract_strided_slice %3 {offsets = [0, 0], sizes = [1, 128], strides = [1, 1]} : vector<8x128xf32> to vector<1x128xf32>
    %8 = vector.extract_strided_slice %3 {offsets = [1, 0], sizes = [1, 128], strides = [1, 1]} : vector<8x128xf32> to vector<1x128xf32>
    %9 = vector.extract_strided_slice %3 {offsets = [2, 0], sizes = [1, 128], strides = [1, 1]} : vector<8x128xf32> to vector<1x128xf32>
    %10 = vector.extract_strided_slice %3 {offsets = [3, 0], sizes = [1, 128], strides = [1, 1]} : vector<8x128xf32> to vector<1x128xf32>
    %cst = arith.constant dense<0.000000e+00> : vector<8x128xf32>
    %11 = tpu.matmul %4, %5, %cst {dimension_numbers = #tpu.dot_dimension_numbers<[1], [0], [0], [1], [0, 0, 1, 1], [], []>} : vector<8x128xbf16>, vector<128x128xbf16>, vector<8x128xf32> -> vector<8x128xf32>
    %12 = vector.broadcast %7 : vector<1x128xf32> to vector<8x128xf32>
    %13 = arith.addf %11, %12 : vector<8x128xf32>
    %cst_7 = arith.constant 5.000000e-01 : f32
    %14 = vector.broadcast %cst_7 : f32 to vector<8x128xf32>
    %15 = arith.mulf %14, %13 : vector<8x128xf32>
    %cst_8 = arith.constant 0.707106769 : f32
    %16 = vector.broadcast %cst_8 : f32 to vector<8x128xf32>
    %17 = arith.mulf %13, %16 : vector<8x128xf32>
    %18 = math.erf %17 : vector<8x128xf32>
    %cst_9 = arith.constant 1.000000e+00 : f32
    %19 = vector.broadcast %cst_9 : f32 to vector<8x128xf32>
    %20 = arith.addf %19, %18 : vector<8x128xf32>
    %21 = arith.mulf %15, %20 : vector<8x128xf32>
    %22 = arith.truncf %21 : vector<8x128xf32> to vector<8x128xbf16>
    %cst_10 = arith.constant dense<0.000000e+00> : vector<8x128xf32>
    %23 = tpu.matmul %22, %6, %cst_10 {dimension_numbers = #tpu.dot_dimension_numbers<[1], [0], [0], [1], [0, 0, 1, 1], [], []>} : vector<8x128xbf16>, vector<128x128xbf16>, vector<8x128xf32> -> vector<8x128xf32>
    %24 = vector.broadcast %8 : vector<1x128xf32> to vector<8x128xf32>
    %25 = arith.addf %23, %24 : vector<8x128xf32>
    %26 = arith.addf %25, %13 : vector<8x128xf32>
    %cst_11 = arith.constant dense<0.000000e+00> : vector<8xf32>
    %27 = vector.multi_reduction <add>, %26, %cst_11 [1] : vector<8x128xf32> to vector<8xf32>
    %28 = vector.shape_cast %27 : vector<8xf32> to vector<8x1xf32>
    %cst_12 = arith.constant 3.125000e-02 : f32
    %29 = vector.broadcast %cst_12 : f32 to vector<8x1xf32>
    %30 = arith.mulf %28, %29 : vector<8x1xf32>
    %31 = vector.broadcast %30 : vector<8x1xf32> to vector<8x128xf32>
    %32 = arith.subf %26, %31 : vector<8x128xf32>
    %cst_13 = arith.constant 0.000000e+00 : f32
    %33 = vector.broadcast %cst_13 : f32 to vector<8x128xf32>
    %34 = arith.select %2, %32, %33 : vector<8x128xi1>, vector<8x128xf32>
    %35 = arith.mulf %34, %34 : vector<8x128xf32>
    %cst_14 = arith.constant dense<0.000000e+00> : vector<8xf32>
    %36 = vector.multi_reduction <add>, %35, %cst_14 [1] : vector<8x128xf32> to vector<8xf32>
    %37 = vector.shape_cast %36 : vector<8xf32> to vector<8x1xf32>
    %cst_15 = arith.constant 3.125000e-02 : f32
    %38 = vector.broadcast %cst_15 : f32 to vector<8x1xf32>
    %39 = arith.mulf %37, %38 : vector<8x1xf32>
    %cst_16 = arith.constant 9.99999974E-6 : f32
    %40 = vector.broadcast %cst_16 : f32 to vector<8x1xf32>
    %41 = arith.addf %39, %40 : vector<8x1xf32>
    %42 = math.rsqrt %41 : vector<8x1xf32>
    %43 = vector.broadcast %42 : vector<8x1xf32> to vector<8x128xf32>
    %44 = arith.mulf %34, %43 : vector<8x128xf32>
    %45 = vector.broadcast %9 : vector<1x128xf32> to vector<8x128xf32>
    %46 = arith.mulf %44, %45 : vector<8x128xf32>
    %47 = vector.broadcast %10 : vector<1x128xf32> to vector<8x128xf32>
    %48 = arith.addf %46, %47 : vector<8x128xf32>
    %c0_17 = arith.constant 0 : index
    %c0_18 = arith.constant 0 : index
    %49 = vector.load %arg2[%c0_17, %c0_18] : memref<8x128xbf16, #tpu.memory_space<vmem>>, vector<8x128xbf16>
    %c0_19 = arith.constant 0 : index
    %c0_20 = arith.constant 0 : index
    %50 = vector.load %arg5[%c0_19, %c0_20] : memref<128x128xbf16, #tpu.memory_space<vmem>>, vector<128x128xbf16>
    %c0_21 = arith.constant 0 : index
    %c0_22 = arith.constant 0 : index
    %51 = vector.load %arg6[%c0_21, %c0_22] : memref<128x128xbf16, #tpu.memory_space<vmem>>, vector<128x128xbf16>
    %52 = vector.extract_strided_slice %3 {offsets = [4, 0], sizes = [1, 128], strides = [1, 1]} : vector<8x128xf32> to vector<1x128xf32>
    %53 = vector.extract_strided_slice %3 {offsets = [5, 0], sizes = [1, 128], strides = [1, 1]} : vector<8x128xf32> to vector<1x128xf32>
    %54 = vector.extract_strided_slice %3 {offsets = [6, 0], sizes = [1, 128], strides = [1, 1]} : vector<8x128xf32> to vector<1x128xf32>
    %55 = vector.extract_strided_slice %3 {offsets = [7, 0], sizes = [1, 128], strides = [1, 1]} : vector<8x128xf32> to vector<1x128xf32>
    %cst_23 = arith.constant dense<0.000000e+00> : vector<8x128xf32>
    %56 = tpu.matmul %49, %50, %cst_23 {dimension_numbers = #tpu.dot_dimension_numbers<[1], [0], [0], [1], [0, 0, 1, 1], [], []>} : vector<8x128xbf16>, vector<128x128xbf16>, vector<8x128xf32> -> vector<8x128xf32>
    %57 = vector.broadcast %52 : vector<1x128xf32> to vector<8x128xf32>
    %58 = arith.addf %56, %57 : vector<8x128xf32>
    %cst_24 = arith.constant 5.000000e-01 : f32
    %59 = vector.broadcast %cst_24 : f32 to vector<8x128xf32>
    %60 = arith.mulf %59, %58 : vector<8x128xf32>
    %cst_25 = arith.constant 0.707106769 : f32
    %61 = vector.broadcast %cst_25 : f32 to vector<8x128xf32>
    %62 = arith.mulf %58, %61 : vector<8x128xf32>
    %63 = math.erf %62 : vector<8x128xf32>
    %cst_26 = arith.constant 1.000000e+00 : f32
    %64 = vector.broadcast %cst_26 : f32 to vector<8x128xf32>
    %65 = arith.addf %64, %63 : vector<8x128xf32>
    %66 = arith.mulf %60, %65 : vector<8x128xf32>
    %67 = arith.truncf %66 : vector<8x128xf32> to vector<8x128xbf16>
    %cst_27 = arith.constant dense<0.000000e+00> : vector<8x128xf32>
    %68 = tpu.matmul %67, %51, %cst_27 {dimension_numbers = #tpu.dot_dimension_numbers<[1], [0], [0], [1], [0, 0, 1, 1], [], []>} : vector<8x128xbf16>, vector<128x128xbf16>, vector<8x128xf32> -> vector<8x128xf32>
    %69 = vector.broadcast %53 : vector<1x128xf32> to vector<8x128xf32>
    %70 = arith.addf %68, %69 : vector<8x128xf32>
    %71 = arith.addf %70, %58 : vector<8x128xf32>
    %cst_28 = arith.constant dense<0.000000e+00> : vector<8xf32>
    %72 = vector.multi_reduction <add>, %71, %cst_28 [1] : vector<8x128xf32> to vector<8xf32>
    %73 = vector.shape_cast %72 : vector<8xf32> to vector<8x1xf32>
    %cst_29 = arith.constant 3.125000e-02 : f32
    %74 = vector.broadcast %cst_29 : f32 to vector<8x1xf32>
    %75 = arith.mulf %73, %74 : vector<8x1xf32>
    %76 = vector.broadcast %75 : vector<8x1xf32> to vector<8x128xf32>
    %77 = arith.subf %71, %76 : vector<8x128xf32>
    %cst_30 = arith.constant 0.000000e+00 : f32
    %78 = vector.broadcast %cst_30 : f32 to vector<8x128xf32>
    %79 = arith.select %2, %77, %78 : vector<8x128xi1>, vector<8x128xf32>
    %80 = arith.mulf %79, %79 : vector<8x128xf32>
    %cst_31 = arith.constant dense<0.000000e+00> : vector<8xf32>
    %81 = vector.multi_reduction <add>, %80, %cst_31 [1] : vector<8x128xf32> to vector<8xf32>
    %82 = vector.shape_cast %81 : vector<8xf32> to vector<8x1xf32>
    %cst_32 = arith.constant 3.125000e-02 : f32
    %83 = vector.broadcast %cst_32 : f32 to vector<8x1xf32>
    %84 = arith.mulf %82, %83 : vector<8x1xf32>
    %cst_33 = arith.constant 9.99999974E-6 : f32
    %85 = vector.broadcast %cst_33 : f32 to vector<8x1xf32>
    %86 = arith.addf %84, %85 : vector<8x1xf32>
    %87 = math.rsqrt %86 : vector<8x1xf32>
    %88 = vector.broadcast %87 : vector<8x1xf32> to vector<8x128xf32>
    %89 = arith.mulf %79, %88 : vector<8x128xf32>
    %90 = vector.broadcast %54 : vector<1x128xf32> to vector<8x128xf32>
    %91 = arith.mulf %89, %90 : vector<8x128xf32>
    %92 = vector.broadcast %55 : vector<1x128xf32> to vector<8x128xf32>
    %93 = arith.addf %91, %92 : vector<8x128xf32>
    %c8_i32 = arith.constant 8 : i32
    %94 = arith.muli %arg0, %c8_i32 : i32
    %95 = tpu.assume_multiple %94, 8 : i32
    %96 = arith.truncf %48 : vector<8x128xf32> to vector<8x128xbf16>
    %97 = arith.index_cast %95 : i32 to index
    %c0_34 = arith.constant 0 : index
    %98 = vector.load %arg9[%97, %c0_34] : memref<8x128xbf16, #tpu.memory_space<vmem>>, vector<8x128xbf16>
    tpu.vector_store %arg9[%97, %c0_34], %96 {strides = array<i32>} : memref<8x128xbf16, #tpu.memory_space<vmem>>, vector<8x128xbf16>,
    %99 = arith.truncf %93 : vector<8x128xf32> to vector<8x128xbf16>
    %100 = arith.index_cast %95 : i32 to index
    %c0_35 = arith.constant 0 : index
    %101 = vector.load %arg10[%100, %c0_35] : memref<8x128xbf16, #tpu.memory_space<vmem>>, vector<8x128xbf16>
    tpu.vector_store %arg10[%100, %c0_35], %99 {strides = array<i32>} : memref<8x128xbf16, #tpu.memory_space<vmem>>, vector<8x128xbf16>,
    %c0_i32 = arith.constant 0 : i32
    %102 = arith.cmpi eq, %arg0, %c0_i32 : i32
    %103 = arith.extui %102 : i1 to i32
    %c0_i32_36 = arith.constant 0 : i32
    %104 = arith.cmpi ne, %103, %c0_i32_36 : i32
    scf.if %104 {
      %c0_37 = arith.constant 0 : index
      %c0_38 = arith.constant 0 : index
      %105 = vector.load %arg9[%c0_37, %c0_38] : memref<8x128xbf16, #tpu.memory_space<vmem>>, vector<8x128xbf16>
      %c0_39 = arith.constant 0 : index
      %c0_40 = arith.constant 0 : index
      %106 = vector.load %arg10[%c0_39, %c0_40] : memref<8x128xbf16, #tpu.memory_space<vmem>>, vector<8x128xbf16>
      %107 = tpu.iota {dimensions = array<i32: 0>} : vector<8x8xi32>
      %108 = tpu.iota {dimensions = array<i32: 1>} : vector<8x8xi32>
      %c8_i32_41 = arith.constant 8 : i32
      %109 = vector.broadcast %c8_i32_41 : i32 to vector<8x8xi32>
      %110 = arith.cmpi slt, %107, %109 : vector<8x8xi32>
      %c8_i32_42 = arith.constant 8 : i32
      %111 = vector.broadcast %c8_i32_42 : i32 to vector<8x8xi32>
      %112 = arith.cmpi slt, %108, %111 : vector<8x8xi32>
      %113 = arith.andi %110, %112 : vector<8x8xi1>
      %cst_43 = arith.constant dense<0.000000e+00> : vector<8x8xf32>
      %114 = tpu.matmul %105, %105, %cst_43 {dimension_numbers = #tpu.dot_dimension_numbers<[1], [1], [0], [0], [0, 0, 1, 0], [], []>} : vector<8x128xbf16>, vector<8x128xbf16>, vector<8x8xf32> -> vector<8x8xf32>
      %cst_44 = arith.constant dense<0.000000e+00> : vector<8x8xf32>
      %115 = tpu.matmul %106, %106, %cst_44 {dimension_numbers = #tpu.dot_dimension_numbers<[1], [1], [0], [0], [0, 0, 1, 0], [], []>} : vector<8x128xbf16>, vector<8x128xbf16>, vector<8x8xf32> -> vector<8x8xf32>
      %116 = arith.addf %114, %115 : vector<8x8xf32>
      %cst_45 = arith.constant 5.000000e-01 : f32
      %117 = vector.broadcast %cst_45 : f32 to vector<8x8xf32>
      %118 = arith.mulf %116, %117 : vector<8x8xf32>
      %cst_46 = arith.constant -1.000000e+30 : f32
      %119 = vector.broadcast %cst_46 : f32 to vector<8x8xf32>
      %120 = arith.select %113, %118, %119 : vector<8x8xi1>, vector<8x8xf32>
      %cst_47 = arith.constant dense<0xFF800000> : vector<8xf32>
      %121 = vector.multi_reduction <maximumf>, %120, %cst_47 [1] : vector<8x8xf32> to vector<8xf32>
      %122 = vector.shape_cast %121 : vector<8xf32> to vector<8x1xf32>
      %123 = vector.broadcast %122 : vector<8x1xf32> to vector<8x8xf32>
      %124 = arith.subf %120, %123 : vector<8x8xf32>
      %125 = math.exp %124 : vector<8x8xf32>
      %cst_48 = arith.constant dense<0.000000e+00> : vector<8xf32>
      %126 = vector.multi_reduction <add>, %125, %cst_48 [1] : vector<8x8xf32> to vector<8xf32>
      %127 = vector.shape_cast %126 : vector<8xf32> to vector<8x1xf32>
      %128 = tpu.reciprocal %127 {approx = true} : vector<8x1xf32> -> vector<8x1xf32>
      %129 = vector.broadcast %128 : vector<8x1xf32> to vector<8x8xf32>
      %130 = arith.mulf %125, %129 : vector<8x8xf32>
      %cst_49 = arith.constant 0.000000e+00 : f32
      %131 = vector.broadcast %cst_49 : f32 to vector<8x8xf32>
      %132 = arith.select %113, %130, %131 : vector<8x8xi1>, vector<8x8xf32>
      %cst_50 = arith.constant dense<0.000000e+00> : vector<8x8xf32>
      %133 = tpu.matmul %106, %105, %cst_50 {dimension_numbers = #tpu.dot_dimension_numbers<[1], [1], [0], [0], [0, 0, 1, 0], [], []>} : vector<8x128xbf16>, vector<8x128xbf16>, vector<8x8xf32> -> vector<8x8xf32>
      %cst_51 = arith.constant 1.000000e+00 : f32
      %134 = vector.broadcast %cst_51 : f32 to vector<8x8xf32>
      %135 = arith.mulf %133, %134 : vector<8x8xf32>
      %cst_52 = arith.constant -1.000000e+30 : f32
      %136 = vector.broadcast %cst_52 : f32 to vector<8x8xf32>
      %137 = arith.select %113, %135, %136 : vector<8x8xi1>, vector<8x8xf32>
      %cst_53 = arith.constant dense<0xFF800000> : vector<8xf32>
      %138 = vector.multi_reduction <maximumf>, %137, %cst_53 [1] : vector<8x8xf32> to vector<8xf32>
      %139 = vector.shape_cast %138 : vector<8xf32> to vector<8x1xf32>
      %140 = vector.broadcast %139 : vector<8x1xf32> to vector<8x8xf32>
      %141 = arith.subf %137, %140 : vector<8x8xf32>
      %142 = math.exp %141 : vector<8x8xf32>
      %cst_54 = arith.constant dense<0.000000e+00> : vector<8xf32>
      %143 = vector.multi_reduction <add>, %142, %cst_54 [1] : vector<8x8xf32> to vector<8xf32>
      %144 = vector.shape_cast %143 : vector<8xf32> to vector<8x1xf32>
      %145 = math.log %144 : vector<8x1xf32>
      %146 = arith.addf %145, %139 : vector<8x1xf32>
      %cst_55 = arith.constant 0.000000e+00 : f32
      %147 = vector.broadcast %cst_55 : f32 to vector<8x8xf32>
      %148 = arith.subf %147, %132 : vector<8x8xf32>
      %149 = vector.broadcast %146 : vector<8x1xf32> to vector<8x8xf32>
      %150 = arith.subf %137, %149 : vector<8x8xf32>
      %151 = arith.mulf %148, %150 : vector<8x8xf32>
      %cst_56 = arith.constant dense<0.000000e+00> : vector<8xf32>
      %152 = vector.multi_reduction <add>, %151, %cst_56 [1] : vector<8x8xf32> to vector<8xf32>
      %153 = vector.shape_cast %152 : vector<8xf32> to vector<8x1xf32>
      %cst_57 = arith.constant dense<0xFF800000> : vector<8xf32>
      %154 = vector.multi_reduction <maximumf>, %137, %cst_57 [0] : vector<8x8xf32> to vector<8xf32>
      %155 = vector.shape_cast %154 : vector<8xf32> to vector<1x8xf32>
      %156 = vector.broadcast %155 : vector<1x8xf32> to vector<8x8xf32>
      %157 = arith.subf %137, %156 : vector<8x8xf32>
      %158 = math.exp %157 : vector<8x8xf32>
      %cst_58 = arith.constant dense<0.000000e+00> : vector<8xf32>
      %159 = vector.multi_reduction <add>, %158, %cst_58 [0] : vector<8x8xf32> to vector<8xf32>
      %160 = vector.shape_cast %159 : vector<8xf32> to vector<1x8xf32>
      %161 = math.log %160 : vector<1x8xf32>
      %162 = arith.addf %161, %155 : vector<1x8xf32>
      %cst_59 = arith.constant 0.000000e+00 : f32
      %163 = vector.broadcast %cst_59 : f32 to vector<8x8xf32>
      %164 = arith.subf %163, %132 : vector<8x8xf32>
      %165 = vector.broadcast %162 : vector<1x8xf32> to vector<8x8xf32>
      %166 = arith.subf %137, %165 : vector<8x8xf32>
      %167 = arith.mulf %164, %166 : vector<8x8xf32>
      %cst_60 = arith.constant dense<0.000000e+00> : vector<8xf32>
      %168 = vector.multi_reduction <add>, %167, %cst_60 [0] : vector<8x8xf32> to vector<8xf32>
      %169 = vector.shape_cast %168 : vector<8xf32> to vector<1x8xf32>
      %cst_61 = arith.constant dense<0.000000e+00> : vector<1xf32>
      %170 = vector.multi_reduction <add>, %153, %cst_61 [0] : vector<8x1xf32> to vector<1xf32>
      %171 = vector.shape_cast %170 : vector<1xf32> to vector<1x1xf32>
      %cst_62 = arith.constant dense<0.000000e+00> : vector<1xf32>
      %172 = vector.multi_reduction <add>, %169, %cst_62 [1] : vector<1x8xf32> to vector<1xf32>
      %173 = vector.shape_cast %172 : vector<1xf32> to vector<1x1xf32>
      %174 = arith.addf %171, %173 : vector<1x1xf32>
      %cst_63 = arith.constant 6.250000e-02 : f32
      %175 = vector.broadcast %cst_63 : f32 to vector<1x1xf32>
      %176 = arith.mulf %174, %175 : vector<1x1xf32>
      %177 = vector.shape_cast %176 : vector<1x1xf32> to vector<1x1xf32>
      %178 = vector.broadcast %177 : vector<1x1xf32> to vector<1x128xf32>
      %c0_64 = arith.constant 0 : index
      %c0_65 = arith.constant 0 : index
      %179 = vector.load %arg8[%c0_64, %c0_65] : memref<1x128xf32, #tpu.memory_space<vmem>>, vector<1x128xf32>
      tpu.vector_store %arg8[%c0_64, %c0_65], %178 {strides = array<i32>} : memref<1x128xf32, #tpu.memory_space<vmem>>, vector<1x128xf32>,
    } else {
    }
    return
  }
  func.func @transform_0(%arg0: i32) -> (i32, i32) {
    %c0_i32 = arith.constant 0 : i32
    %c0_i32_0 = arith.constant 0 : i32
    return %arg0, %c0_i32 : i32, i32
  }
  func.func @transform_1(%arg0: i32) -> (i32, i32) {
    %c0_i32 = arith.constant 0 : i32
    %c0_i32_0 = arith.constant 0 : i32
    return %arg0, %c0_i32 : i32, i32
  }
  func.func @transform_2(%arg0: i32) -> (i32, i32) {
    %c0_i32 = arith.constant 0 : i32
    %c0_i32_0 = arith.constant 0 : i32
    %c0_i32_1 = arith.constant 0 : i32
    return %c0_i32, %c0_i32_0 : i32, i32
  }
  func.func @transform_3(%arg0: i32) -> (i32, i32) {
    %c0_i32 = arith.constant 0 : i32
    %c0_i32_0 = arith.constant 0 : i32
    %c0_i32_1 = arith.constant 0 : i32
    return %c0_i32, %c0_i32_0 : i32, i32
  }
  func.func @transform_4(%arg0: i32) -> (i32, i32) {
    %c0_i32 = arith.constant 0 : i32
    %c0_i32_0 = arith.constant 0 : i32
    %c0_i32_1 = arith.constant 0 : i32
    return %c0_i32, %c0_i32_0 : i32, i32
  }
  func.func @transform_5(%arg0: i32) -> (i32, i32) {
    %c0_i32 = arith.constant 0 : i32
    %c0_i32_0 = arith.constant 0 : i32
    %c0_i32_1 = arith.constant 0 : i32
    return %c0_i32, %c0_i32_0 : i32, i32
  }
  func.func @transform_6(%arg0: i32) -> (i32, i32) {
    %c0_i32 = arith.constant 0 : i32
    %c0_i32_0 = arith.constant 0 : i32
    %c0_i32_1 = arith.constant 0 : i32
    return %c0_i32, %c0_i32_0 : i32, i32
  }
  func.func @transform_7(%arg0: i32) -> (i32, i32) {
    %c0_i32 = arith.constant 0 : i32
    %c0_i32_0 = arith.constant 0 : i32
    %c0_i32_1 = arith.constant 0 : i32
    return %c0_i32, %c0_i32_0 : i32, i32
  }
}

</mosaic_0001>

<llo_original>
// kernel: tpu_custom_call.1
$region0: #{tpu_custom_call.1}
  #allocation0 [shape = 'u32[]', space=smem, size = 0x4, offset = 0x4, fixed_abs, tag = 'smem constant byte address 0x4 - core index']
  #allocation1 [shape = 'u32[144,128]{1,0:T(1,128)}', space=vmem, size = 0x12000, scoped, tag = 'internal scratch']
  #allocation2 [shape = 'bf16[8,128]{1,0:T(8,128)(2,1)}', space=vmem, size = 0x800, scoped, tag = 'scratch operand']
  #allocation3 [shape = 'bf16[8,128]{1,0:T(8,128)(2,1)}', space=vmem, size = 0x800, scoped, tag = 'scratch operand']
  %s0 = inlined_call_operand.hbm [shape: bf16[8,128], index: 0, kind: input, shape index: {}]
  %s1 = inlined_call_operand.hbm [shape: bf16[8,128], index: 1, kind: input, shape index: {}]
  %s2 = inlined_call_operand.hbm [shape: bf16[128,128], index: 2, kind: input, shape index: {}]
  %s3 = inlined_call_operand.hbm [shape: bf16[128,128], index: 3, kind: input, shape index: {}]
  %s4 = inlined_call_operand.hbm [shape: bf16[128,128], index: 4, kind: input, shape index: {}]
  %s5 = inlined_call_operand.hbm [shape: bf16[128,128], index: 5, kind: input, shape index: {}]
  %s6 = inlined_call_operand.vmem [shape: f32[8,128], index: 6, kind: input, shape index: {}]
  %s7 = inlined_call_operand.hbm [shape: f32[1,128], index: 7, kind: output, shape index: {}]
  %s8 = sld [smem:[#allocation0]]
  $region66: #{tpu_custom_call.1} parent=0
    _
  %s10 = ssub.s32 1, %s8
  %s11 = scalar_select 0, %s10, %s8
  $region1: #{tpu_custom_call.1} parent=0
    #allocation4 [shape = 'u8[2048]{0}', space=vmem, size = 0x800, scoped, tag = 'input window, operand 0, single buffered']
    #allocation5 [shape = 's32[1]{0}', space=sflag, size = 0x4, scoped, tag = 'scoped memory for tpu_custom_call.1']
    #allocation6 [shape = 's32[1]{0}', space=sflag, size = 0x4, scoped, tag = 'scoped memory for tpu_custom_call.1']
    #allocation7 [shape = 'u8[2048]{0}', space=vmem, size = 0x800, scoped, tag = 'input window, operand 1, single buffered']
    #allocation8 [shape = 's32[1]{0}', space=sflag, size = 0x4, scoped, tag = 'scoped memory for tpu_custom_call.1']
    #allocation9 [shape = 'u8[32768]{0}', space=vmem, size = 0x8000, scoped, tag = 'input window, operand 2, single buffered']
    #allocation10 [shape = 'u8[32768]{0}', space=vmem, size = 0x8000, scoped, tag = 'input window, operand 3, single buffered']
    #allocation11 [shape = 's32[1]{0}', space=sflag, size = 0x4, scoped, tag = 'scoped memory for tpu_custom_call.1']
    #allocation12 [shape = 'u8[32768]{0}', space=vmem, size = 0x8000, scoped, tag = 'input window, operand 4, single buffered']
    #allocation13 [shape = 'u8[32768]{0}', space=vmem, size = 0x8000, scoped, tag = 'input window, operand 5, single buffered']
    #allocation14 [shape = 's32[1]{0}', space=sflag, size = 0x4, scoped, tag = 'scoped memory for tpu_custom_call.1']
    #allocation15 [shape = 'u8[512]{0}', space=vmem, size = 0x400, scoped, tag = 'output window, operand 0, single buffered']
    %12 = vsyncpa [#allocation5], 0
    %13 = vsyncpa [#allocation8], 0
    %14 = vsyncpa [#allocation11], 0
    %15 = vsyncpa [#allocation14], 0
    %16 = vsyncpa [#allocation6], 0
    // Predicated region
    $region2: #{tpu_custom_call.1} parent=1 // pred_check
      _
    $region3: #{tpu_custom_call.1} parent=1 // pred_check_branch
      %18 = sbr.rel (0) target = $region5
    $region4: #{tpu_custom_call.1} parent=1 // pred_region
      %s20 = ssub.s32 64, 64
      %21 = vsyncadd [#allocation5], %s20
      %s23 = sshll.u32 [#allocation4], 4
      %s24 = int_to_ptr.vmem [resolvable:$true] %s23
      %26 = dma.hbm_to_vmem [thread:$0]  %s0, 64, %s24, [#allocation5]
    $region5: #{tpu_custom_call.1} parent=1 // pred_fallthru
      _
    // Predicated region
    $region6: #{tpu_custom_call.1} parent=1 // pred_check
      _
    $region7: #{tpu_custom_call.1} parent=1 // pred_check_branch
      %28 = sbr.rel (0) target = $region9
    $region8: #{tpu_custom_call.1} parent=1 // pred_region
      %s30 = ssub.s32 64, 64
      %31 = vsyncadd [#allocation8], %s30
      %s33 = sshll.u32 [#allocation7], 4
      %s34 = int_to_ptr.vmem [resolvable:$true] %s33
      %36 = dma.hbm_to_vmem [thread:$0]  %s1, 64, %s34, [#allocation8]
    $region9: #{tpu_custom_call.1} parent=1 // pred_fallthru
      _
    // Predicated region
    $region10: #{tpu_custom_call.1} parent=1 // pred_check
      _
    $region11: #{tpu_custom_call.1} parent=1 // pred_check_branch
      %38 = sbr.rel (0) target = $region13
    $region12: #{tpu_custom_call.1} parent=1 // pred_region
      %s40 = ssub.s32 1024, 1024
      %41 = vsyncadd [#allocation8], %s40
      %s42 = sshll.u32 [#allocation9], 4
      %s43 = int_to_ptr.vmem [resolvable:$true] %s42
      %48 = dma.hbm_to_vmem [thread:$0]  %s2, 1024, %s43, [#allocation8], 64, 64, 4
    $region13: #{tpu_custom_call.1} parent=1 // pred_fallthru
      _
    // Predicated region
    $region14: #{tpu_custom_call.1} parent=1 // pred_check
      _
    $region15: #{tpu_custom_call.1} parent=1 // pred_check_branch
      %50 = sbr.rel (0) target = $region17
    $region16: #{tpu_custom_call.1} parent=1 // pred_region
      %s52 = ssub.s32 1024, 1024
      %53 = vsyncadd [#allocation11], %s52
      %s54 = sshll.u32 [#allocation10], 4
      %s55 = int_to_ptr.vmem [resolvable:$true] %s54
      %60 = dma.hbm_to_vmem [thread:$0]  %s3, 1024, %s55, [#allocation11], 64, 64, 4
    $region17: #{tpu_custom_call.1} parent=1 // pred_fallthru
      _
    // Predicated region
    $region18: #{tpu_custom_call.1} parent=1 // pred_check
      _
    $region19: #{tpu_custom_call.1} parent=1 // pred_check_branch
      %62 = sbr.rel (0) target = $region21
    $region20: #{tpu_custom_call.1} parent=1 // pred_region
      %s64 = ssub.s32 1024, 1024
      %65 = vsyncadd [#allocation11], %s64
      %s66 = sshll.u32 [#allocation12], 4
      %s67 = int_to_ptr.vmem [resolvable:$true] %s66
      %72 = dma.hbm_to_vmem [thread:$0]  %s4, 1024, %s67, [#allocation11], 64, 64, 4
    $region21: #{tpu_custom_call.1} parent=1 // pred_fallthru
      _
    // Predicated region
    $region22: #{tpu_custom_call.1} parent=1 // pred_check
      _
    $region23: #{tpu_custom_call.1} parent=1 // pred_check_branch
      %74 = sbr.rel (0) target = $region25
    $region24: #{tpu_custom_call.1} parent=1 // pred_region
      %s76 = ssub.s32 1024, 1024
      %77 = vsyncadd [#allocation14], %s76
      %s78 = sshll.u32 [#allocation13], 4
      %s79 = int_to_ptr.vmem [resolvable:$true] %s78
      %84 = dma.hbm_to_vmem [thread:$0]  %s5, 1024, %s79, [#allocation14], 64, 64, 4
    $region25: #{tpu_custom_call.1} parent=1 // pred_fallthru
      _
    // Predicated region
    $region26: #{tpu_custom_call.1} parent=1 // pred_check
      _
    $region27: #{tpu_custom_call.1} parent=1 // pred_check_branch
      %86 = sbr.rel (0) target = $region29
    $region28: #{tpu_custom_call.1} parent=1 // pred_region
      _
    $region29: #{tpu_custom_call.1} parent=1 // pred_fallthru
      _
    // Predicated region
    $region30: #{tpu_custom_call.1} parent=1 // pred_check
      _
    $region31: #{tpu_custom_call.1} parent=1 // pred_check_branch
      %88 = sbr.rel (0) target = $region33
    $region32: #{tpu_custom_call.1} parent=1 // pred_region
      %89 = dma.done [#allocation5], 64
    $region33: #{tpu_custom_call.1} parent=1 // pred_fallthru
      _
    // Predicated region
    $region34: #{tpu_custom_call.1} parent=1 // pred_check
      _
    $region35: #{tpu_custom_call.1} parent=1 // pred_check_branch
      %91 = sbr.rel (0) target = $region37
    $region36: #{tpu_custom_call.1} parent=1 // pred_region
      %92 = dma.done [#allocation8], 64
    $region37: #{tpu_custom_call.1} parent=1 // pred_fallthru
      _
    // Predicated region
    $region38: #{tpu_custom_call.1} parent=1 // pred_check
      _
    $region39: #{tpu_custom_call.1} parent=1 // pred_check_branch
      %94 = sbr.rel (0) target = $region41
    $region40: #{tpu_custom_call.1} parent=1 // pred_region
      %95 = dma.done [#allocation8], 1024
    $region41: #{tpu_custom_call.1} parent=1 // pred_fallthru
      _
    // Predicated region
    $region42: #{tpu_custom_call.1} parent=1 // pred_check
      _
    $region43: #{tpu_custom_call.1} parent=1 // pred_check_branch
      %97 = sbr.rel (0) target = $region45
    $region44: #{tpu_custom_call.1} parent=1 // pred_region
      %98 = dma.done [#allocation11], 1024
    $region45: #{tpu_custom_call.1} parent=1 // pred_fallthru
      _
    // Predicated region
    $region46: #{tpu_custom_call.1} parent=1 // pred_check
      _
    $region47: #{tpu_custom_call.1} parent=1 // pred_check_branch
      %100 = sbr.rel (0) target = $region49
    $region48: #{tpu_custom_call.1} parent=1 // pred_region
      %101 = dma.done [#allocation11], 1024
    $region49: #{tpu_custom_call.1} parent=1 // pred_fallthru
      _
    // Predicated region
    $region50: #{tpu_custom_call.1} parent=1 // pred_check
      _
    $region51: #{tpu_custom_call.1} parent=1 // pred_check_branch
      %103 = sbr.rel (0) target = $region53
    $region52: #{tpu_custom_call.1} parent=1 // pred_region
      %104 = dma.done [#allocation14], 1024
    $region53: #{tpu_custom_call.1} parent=1 // pred_fallthru
      _
    %v106 = vlaneseq
    %v107 = vand.u32 %v106, 127
    %vm108 = vcmp.lt.s32.totalorder %v107, 32
    %v109 = vld [vmem:[%s6] sm:$0xff]
    %v110 = vld [vmem:[#allocation4] sm:$0xf]
    %v111 = vld [vmem:[#allocation9] sm:$0xf]
    %v112 = vld [vmem:[#allocation9 + $0x4] sm:$0xf]
    %v113 = vld [vmem:[#allocation9 + $0x8] sm:$0xf]
    %v114 = vld [vmem:[#allocation9 + $0xc] sm:$0xf]
    %v115 = vld [vmem:[#allocation9 + $0x10] sm:$0xf]
    %v116 = vld [vmem:[#allocation9 + $0x14] sm:$0xf]
    %v117 = vld [vmem:[#allocation9 + $0x18] sm:$0xf]
    %v118 = vld [vmem:[#allocation9 + $0x1c] sm:$0xf]
    %v119 = vld [vmem:[#allocation9 + $0x20] sm:$0xf]
    %v120 = vld [vmem:[#allocation9 + $0x24] sm:$0xf]
    %v121 = vld [vmem:[#allocation9 + $0x28] sm:$0xf]
    %v122 = vld [vmem:[#allocation9 + $0x2c] sm:$0xf]
    %v123 = vld [vmem:[#allocation9 + $0x30] sm:$0xf]
    %v124 = vld [vmem:[#allocation9 + $0x34] sm:$0xf]
    %v125 = vld [vmem:[#allocation9 + $0x38] sm:$0xf]
    %v126 = vld [vmem:[#allocation9 + $0x3c] sm:$0xf]
    %v127 = vld [vmem:[#allocation10] sm:$0xf]
    %v128 = vld [vmem:[#allocation10 + $0x4] sm:$0xf]
    %v129 = vld [vmem:[#allocation10 + $0x8] sm:$0xf]
    %v130 = vld [vmem:[#allocation10 + $0xc] sm:$0xf]
    %v131 = vld [vmem:[#allocation10 + $0x10] sm:$0xf]
    %v132 = vld [vmem:[#allocation10 + $0x14] sm:$0xf]
    %v133 = vld [vmem:[#allocation10 + $0x18] sm:$0xf]
    %v134 = vld [vmem:[#allocation10 + $0x1c] sm:$0xf]
    %v135 = vld [vmem:[#allocation10 + $0x20] sm:$0xf]
    %v136 = vld [vmem:[#allocation10 + $0x24] sm:$0xf]
    %v137 = vld [vmem:[#allocation10 + $0x28] sm:$0xf]
    %v138 = vld [vmem:[#allocation10 + $0x2c] sm:$0xf]
    %v139 = vld [vmem:[#allocation10 + $0x30] sm:$0xf]
    %v140 = vld [vmem:[#allocation10 + $0x34] sm:$0xf]
    %v141 = vld [vmem:[#allocation10 + $0x38] sm:$0xf]
    %v142 = vld [vmem:[#allocation10 + $0x3c] sm:$0xf]
    %v143 = vlaneseq
    %v144 = vshrl.u32 %v143, 7
    %v145 = vsub.s32 0, %v144
    %v146 = vrot.slane %v109, %v145
    %v163 = vunpack.c.l.b16 %v111
    %v164 = vunpack.c.l.b16 %v112
    %v165 = vunpack.c.l.b16 %v113
    %v166 = vunpack.c.l.b16 %v114
    %v167 = vunpack.c.l.b16 %v115
    %v168 = vunpack.c.l.b16 %v116
    %v169 = vunpack.c.l.b16 %v117
    %v170 = vunpack.c.l.b16 %v118
    %v171 = vunpack.c.l.b16 %v119
    %v172 = vunpack.c.l.b16 %v120
    %v173 = vunpack.c.l.b16 %v121
    %v174 = vunpack.c.l.b16 %v122
    %v175 = vunpack.c.l.b16 %v123
    %v176 = vunpack.c.l.b16 %v124
    %v177 = vunpack.c.l.b16 %v125
    %v178 = vunpack.c.l.b16 %v126
    %v179 = vpack.c.b16 %v164, %v163
    %v180 = vpack.c.b16 %v166, %v165
    %v181 = vpack.c.b16 %v168, %v167
    %v182 = vpack.c.b16 %v170, %v169
    %v183 = vpack.c.b16 %v172, %v171
    %v184 = vpack.c.b16 %v174, %v173
    %v185 = vpack.c.b16 %v176, %v175
    %v186 = vpack.c.b16 %v178, %v177
    %195 = vmatprep.subr.bf16.mxu0 0
    %196 = vmatpush1.bf16.msra.mxu0 %v179
    %197 = vmatprep.subr.bf16.mxu0 0
    %198 = vmatpush1.bf16.msra.mxu0 %v180
    %199 = vmatprep.subr.bf16.mxu0 0
    %200 = vmatpush1.bf16.msra.mxu0 %v181
    %201 = vmatprep.subr.bf16.mxu0 0
    %202 = vmatpush1.bf16.msra.mxu0 %v182
    %203 = vmatprep.subr.bf16.mxu0 0
    %204 = vmatpush1.bf16.msra.mxu0 %v183
    %205 = vmatprep.subr.bf16.mxu0 0
    %206 = vmatpush1.bf16.msra.mxu0 %v184
    %207 = vmatprep.subr.bf16.mxu0 0
    %208 = vmatpush1.bf16.msra.mxu0 %v185
    %209 = vmatprep.subr.bf16.mxu0 0
    %210 = vmatpush1.bf16.msra.mxu0 %v186
    %211 = vmatprep.subr.bf16.mxu0 0
    %212 = vmatpush1.bf16.msra.mxu0 0
    %213 = vmatprep.subr.bf16.mxu0 0
    %214 = vmatpush1.bf16.msra.mxu0 0
    %215 = vmatprep.subr.bf16.mxu0 0
    %216 = vmatpush1.bf16.msra.mxu0 0
    %217 = vmatprep.subr.bf16.mxu0 0
    %218 = vmatpush1.bf16.msra.mxu0 0
    %219 = vmatprep.subr.bf16.mxu0 0
    %220 = vmatpush1.bf16.msra.mxu0 0
    %221 = vmatprep.subr.bf16.mxu0 0
    %222 = vmatpush1.bf16.msra.mxu0 0
    %223 = vmatprep.subr.bf16.mxu0 0
    %224 = vmatpush1.bf16.msra.mxu0 0
    %225 = vmatprep.subr.bf16.mxu0 0
    %226 = vmatpush1.bf16.msra.mxu0 0
    %227 = vmatprep.mubr.bf16.mxu0 0
    %228 = vmatmul.mubr.bf16.gmra.mrb[0].mxu0 %v110
    %v229 = vpop.f32.mrb[0].mxu0
    %v230 = vadd.f32 %v146, %v229
    %v231 = vpop.f32.mrb[0].mxu0
    %v232 = vpop.f32.mrb[0].mxu0
    %v233 = vpop.f32.mrb[0].mxu0
    %234 = vdwg.mxu0
    %v235 = vmul.f32 %v230, 0.5
    %v236 = vmul.f32 %v230, 0.70710677
    %v237 = verf.f32.pop %v236
    %v238 = vadd.f32 %v237, 1.0
    %v239 = vmul.f32 %v235, %v238
    %v240 = vpack.c.bf16 %v239, %v239
    %v241 = vlaneseq
    %v242 = vshrl.u32 %v241, 7
    %v243 = vsub.s32 1, %v242
    %v244 = vrot.slane %v109, %v243
    %v261 = vunpack.c.l.b16 %v127
    %v262 = vunpack.c.l.b16 %v128
    %v263 = vunpack.c.l.b16 %v129
    %v264 = vunpack.c.l.b16 %v130
    %v265 = vunpack.c.l.b16 %v131
    %v266 = vunpack.c.l.b16 %v132
    %v267 = vunpack.c.l.b16 %v133
    %v268 = vunpack.c.l.b16 %v134
    %v269 = vunpack.c.l.b16 %v135
    %v270 = vunpack.c.l.b16 %v136
    %v271 = vunpack.c.l.b16 %v137
    %v272 = vunpack.c.l.b16 %v138
    %v273 = vunpack.c.l.b16 %v139
    %v274 = vunpack.c.l.b16 %v140
    %v275 = vunpack.c.l.b16 %v141
    %v276 = vunpack.c.l.b16 %v142
    %v277 = vpack.c.b16 %v262, %v261
    %v278 = vpack.c.b16 %v264, %v263
    %v279 = vpack.c.b16 %v266, %v265
    %v280 = vpack.c.b16 %v268, %v267
    %v281 = vpack.c.b16 %v270, %v269
    %v282 = vpack.c.b16 %v272, %v271
    %v283 = vpack.c.b16 %v274, %v273
    %v284 = vpack.c.b16 %v276, %v275
    %293 = vmatprep.subr.bf16.mxu0 0
    %294 = vmatpush1.bf16.msra.mxu0 %v277
    %295 = vmatprep.subr.bf16.mxu0 0
    %296 = vmatpush1.bf16.msra.mxu0 %v278
    %297 = vmatprep.subr.bf16.mxu0 0
    %298 = vmatpush1.bf16.msra.mxu0 %v279
    %299 = vmatprep.subr.bf16.mxu0 0
    %300 = vmatpush1.bf16.msra.mxu0 %v280
    %301 = vmatprep.subr.bf16.mxu0 0
    %302 = vmatpush1.bf16.msra.mxu0 %v281
    %303 = vmatprep.subr.bf16.mxu0 0
    %304 = vmatpush1.bf16.msra.mxu0 %v282
    %305 = vmatprep.subr.bf16.mxu0 0
    %306 = vmatpush1.bf16.msra.mxu0 %v283
    %307 = vmatprep.subr.bf16.mxu0 0
    %308 = vmatpush1.bf16.msra.mxu0 %v284
    %309 = vmatprep.subr.bf16.mxu0 0
    %310 = vmatpush1.bf16.msra.mxu0 0
    %311 = vmatprep.subr.bf16.mxu0 0
    %312 = vmatpush1.bf16.msra.mxu0 0
    %313 = vmatprep.subr.bf16.mxu0 0
    %314 = vmatpush1.bf16.msra.mxu0 0
    %315 = vmatprep.subr.bf16.mxu0 0
    %316 = vmatpush1.bf16.msra.mxu0 0
    %317 = vmatprep.subr.bf16.mxu0 0
    %318 = vmatpush1.bf16.msra.mxu0 0
    %319 = vmatprep.subr.bf16.mxu0 0
    %320 = vmatpush1.bf16.msra.mxu0 0
    %321 = vmatprep.subr.bf16.mxu0 0
    %322 = vmatpush1.bf16.msra.mxu0 0
    %323 = vmatprep.subr.bf16.mxu0 0
    %324 = vmatpush1.bf16.msra.mxu0 0
    %325 = vmatprep.mubr.bf16.mxu0 0
    %326 = vmatmul.mubr.bf16.gmra.mrb[0].mxu0 %v240
    %v327 = vpop.f32.mrb[0].mxu0
    %v328 = vadd.f32 %v244, %v327
    %v329 = vpop.f32.mrb[0].mxu0
    %v330 = vpop.f32.mrb[0].mxu0
    %v331 = vpop.f32.mrb[0].mxu0
    %332 = vdwg.mxu0
    %v333 = vadd.f32 %v328, %v230
    %334 = vadd.xlane.f32.xlu0 %v333
    %v335 = vpop.xlane.xlu0 %334
    %v336 = vmul.f32 %v335, 0.03125
    %v337 = vsub.f32 %v333, %v336
    %v338 = vsel %vm108, %v337, 0.0
    %v339 = vmul.f32 %v338, %v338
    %340 = vadd.xlane.f32.xlu0 %v339
    %v341 = vpop.xlane.xlu0 %340
    %v342 = vmul.f32 %v341, 0.03125
    %v343 = vadd.f32 %v342, 1e-05
    %v344 = vrsqrt.pop %v343
    %v345 = vmul.f32 %v338, %v344
    %v346 = vlaneseq
    %v347 = vshrl.u32 %v346, 7
    %v348 = vsub.s32 2, %v347
    %v349 = vrot.slane %v109, %v348
    %v350 = vmul.f32 %v345, %v349
    %v351 = vlaneseq
    %v352 = vshrl.u32 %v351, 7
    %v353 = vsub.s32 3, %v352
    %v354 = vrot.slane %v109, %v353
    %v355 = vadd.f32 %v350, %v354
    %v356 = vld [vmem:[#allocation7] sm:$0xf]
    %v357 = vld [vmem:[#allocation12] sm:$0xf]
    %v358 = vld [vmem:[#allocation12 + $0x4] sm:$0xf]
    %v359 = vld [vmem:[#allocation12 + $0x8] sm:$0xf]
    %v360 = vld [vmem:[#allocation12 + $0xc] sm:$0xf]
    %v361 = vld [vmem:[#allocation12 + $0x10] sm:$0xf]
    %v362 = vld [vmem:[#allocation12 + $0x14] sm:$0xf]
    %v363 = vld [vmem:[#allocation12 + $0x18] sm:$0xf]
    %v364 = vld [vmem:[#allocation12 + $0x1c] sm:$0xf]
    %v365 = vld [vmem:[#allocation12 + $0x20] sm:$0xf]
    %v366 = vld [vmem:[#allocation12 + $0x24] sm:$0xf]
    %v367 = vld [vmem:[#allocation12 + $0x28] sm:$0xf]
    %v368 = vld [vmem:[#allocation12 + $0x2c] sm:$0xf]
    %v369 = vld [vmem:[#allocation12 + $0x30] sm:$0xf]
    %v370 = vld [vmem:[#allocation12 + $0x34] sm:$0xf]
    %v371 = vld [vmem:[#allocation12 + $0x38] sm:$0xf]
    %v372 = vld [vmem:[#allocation12 + $0x3c] sm:$0xf]
    %v373 = vld [vmem:[#allocation13] sm:$0xf]
    %v374 = vld [vmem:[#allocation13 + $0x4] sm:$0xf]
    %v375 = vld [vmem:[#allocation13 + $0x8] sm:$0xf]
    %v376 = vld [vmem:[#allocation13 + $0xc] sm:$0xf]
    %v377 = vld [vmem:[#allocation13 + $0x10] sm:$0xf]
    %v378 = vld [vmem:[#allocation13 + $0x14] sm:$0xf]
    %v379 = vld [vmem:[#allocation13 + $0x18] sm:$0xf]
    %v380 = vld [vmem:[#allocation13 + $0x1c] sm:$0xf]
    %v381 = vld [vmem:[#allocation13 + $0x20] sm:$0xf]
    %v382 = vld [vmem:[#allocation13 + $0x24] sm:$0xf]
    %v383 = vld [vmem:[#allocation13 + $0x28] sm:$0xf]
    %v384 = vld [vmem:[#allocation13 + $0x2c] sm:$0xf]
    %v385 = vld [vmem:[#allocation13 + $0x30] sm:$0xf]
    %v386 = vld [vmem:[#allocation13 + $0x34] sm:$0xf]
    %v387 = vld [vmem:[#allocation13 + $0x38] sm:$0xf]
    %v388 = vld [vmem:[#allocation13 + $0x3c] sm:$0xf]
    %v389 = vlaneseq
    %v390 = vshrl.u32 %v389, 7
    %v391 = vsub.s32 4, %v390
    %v392 = vrot.slane %v109, %v391
    %v409 = vunpack.c.l.b16 %v357
    %v410 = vunpack.c.l.b16 %v358
    %v411 = vunpack.c.l.b16 %v359
    %v412 = vunpack.c.l.b16 %v360
    %v413 = vunpack.c.l.b16 %v361
    %v414 = vunpack.c.l.b16 %v362
    %v415 = vunpack.c.l.b16 %v363
    %v416 = vunpack.c.l.b16 %v364
    %v417 = vunpack.c.l.b16 %v365
    %v418 = vunpack.c.l.b16 %v366
    %v419 = vunpack.c.l.b16 %v367
    %v420 = vunpack.c.l.b16 %v368
    %v421 = vunpack.c.l.b16 %v369
    %v422 = vunpack.c.l.b16 %v370
    %v423 = vunpack.c.l.b16 %v371
    %v424 = vunpack.c.l.b16 %v372
    %v425 = vpack.c.b16 %v410, %v409
    %v426 = vpack.c.b16 %v412, %v411
    %v427 = vpack.c.b16 %v414, %v413
    %v428 = vpack.c.b16 %v416, %v415
    %v429 = vpack.c.b16 %v418, %v417
    %v430 = vpack.c.b16 %v420, %v419
    %v431 = vpack.c.b16 %v422, %v421
    %v432 = vpack.c.b16 %v424, %v423
    %441 = vmatprep.subr.bf16.mxu0 0
    %442 = vmatpush1.bf16.msra.mxu0 %v425
    %443 = vmatprep.subr.bf16.mxu0 0
    %444 = vmatpush1.bf16.msra.mxu0 %v426
    %445 = vmatprep.subr.bf16.mxu0 0
    %446 = vmatpush1.bf16.msra.mxu0 %v427
    %447 = vmatprep.subr.bf16.mxu0 0
    %448 = vmatpush1.bf16.msra.mxu0 %v428
    %449 = vmatprep.subr.bf16.mxu0 0
    %450 = vmatpush1.bf16.msra.mxu0 %v429
    %451 = vmatprep.subr.bf16.mxu0 0
    %452 = vmatpush1.bf16.msra.mxu0 %v430
    %453 = vmatprep.subr.bf16.mxu0 0
    %454 = vmatpush1.bf16.msra.mxu0 %v431
    %455 = vmatprep.subr.bf16.mxu0 0
    %456 = vmatpush1.bf16.msra.mxu0 %v432
    %457 = vmatprep.subr.bf16.mxu0 0
    %458 = vmatpush1.bf16.msra.mxu0 0
    %459 = vmatprep.subr.bf16.mxu0 0
    %460 = vmatpush1.bf16.msra.mxu0 0
    %461 = vmatprep.subr.bf16.mxu0 0
    %462 = vmatpush1.bf16.msra.mxu0 0
    %463 = vmatprep.subr.bf16.mxu0 0
    %464 = vmatpush1.bf16.msra.mxu0 0
    %465 = vmatprep.subr.bf16.mxu0 0
    %466 = vmatpush1.bf16.msra.mxu0 0
    %467 = vmatprep.subr.bf16.mxu0 0
    %468 = vmatpush1.bf16.msra.mxu0 0
    %469 = vmatprep.subr.bf16.mxu0 0
    %470 = vmatpush1.bf16.msra.mxu0 0
    %471 = vmatprep.subr.bf16.mxu0 0
    %472 = vmatpush1.bf16.msra.mxu0 0
    %473 = vmatprep.mubr.bf16.mxu0 0
    %474 = vmatmul.mubr.bf16.gmra.mrb[0].mxu0 %v356
    %v475 = vpop.f32.mrb[0].mxu0
    %v476 = vadd.f32 %v392, %v475
    %v477 = vpop.f32.mrb[0].mxu0
    %v478 = vpop.f32.mrb[0].mxu0
    %v479 = vpop.f32.mrb[0].mxu0
    %480 = vdwg.mxu0
    %v481 = vmul.f32 %v476, 0.5
    %v482 = vmul.f32 %v476, 0.70710677
    %v483 = verf.f32.pop %v482
    %v484 = vadd.f32 %v483, 1.0
    %v485 = vmul.f32 %v481, %v484
    %v486 = vpack.c.bf16 %v485, %v485
    %v487 = vlaneseq
    %v488 = vshrl.u32 %v487, 7
    %v489 = vsub.s32 5, %v488
    %v490 = vrot.slane %v109, %v489
    %v507 = vunpack.c.l.b16 %v373
    %v508 = vunpack.c.l.b16 %v374
    %v509 = vunpack.c.l.b16 %v375
    %v510 = vunpack.c.l.b16 %v376
    %v511 = vunpack.c.l.b16 %v377
    %v512 = vunpack.c.l.b16 %v378
    %v513 = vunpack.c.l.b16 %v379
    %v514 = vunpack.c.l.b16 %v380
    %v515 = vunpack.c.l.b16 %v381
    %v516 = vunpack.c.l.b16 %v382
    %v517 = vunpack.c.l.b16 %v383
    %v518 = vunpack.c.l.b16 %v384
    %v519 = vunpack.c.l.b16 %v385
    %v520 = vunpack.c.l.b16 %v386
    %v521 = vunpack.c.l.b16 %v387
    %v522 = vunpack.c.l.b16 %v388
    %v523 = vpack.c.b16 %v508, %v507
    %v524 = vpack.c.b16 %v510, %v509
    %v525 = vpack.c.b16 %v512, %v511
    %v526 = vpack.c.b16 %v514, %v513
    %v527 = vpack.c.b16 %v516, %v515
    %v528 = vpack.c.b16 %v518, %v517
    %v529 = vpack.c.b16 %v520, %v519
    %v530 = vpack.c.b16 %v522, %v521
    %539 = vmatprep.subr.bf16.mxu0 0
    %540 = vmatpush1.bf16.msra.mxu0 %v523
    %541 = vmatprep.subr.bf16.mxu0 0
    %542 = vmatpush1.bf16.msra.mxu0 %v524
    %543 = vmatprep.subr.bf16.mxu0 0
    %544 = vmatpush1.bf16.msra.mxu0 %v525
    %545 = vmatprep.subr.bf16.mxu0 0
    %546 = vmatpush1.bf16.msra.mxu0 %v526
    %547 = vmatprep.subr.bf16.mxu0 0
    %548 = vmatpush1.bf16.msra.mxu0 %v527
    %549 = vmatprep.subr.bf16.mxu0 0
    %550 = vmatpush1.bf16.msra.mxu0 %v528
    %551 = vmatprep.subr.bf16.mxu0 0
    %552 = vmatpush1.bf16.msra.mxu0 %v529
    %553 = vmatprep.subr.bf16.mxu0 0
    %554 = vmatpush1.bf16.msra.mxu0 %v530
    %555 = vmatprep.subr.bf16.mxu0 0
    %556 = vmatpush1.bf16.msra.mxu0 0
    %557 = vmatprep.subr.bf16.mxu0 0
    %558 = vmatpush1.bf16.msra.mxu0 0
    %559 = vmatprep.subr.bf16.mxu0 0
    %560 = vmatpush1.bf16.msra.mxu0 0
    %561 = vmatprep.subr.bf16.mxu0 0
    %562 = vmatpush1.bf16.msra.mxu0 0
    %563 = vmatprep.subr.bf16.mxu0 0
    %564 = vmatpush1.bf16.msra.mxu0 0
    %565 = vmatprep.subr.bf16.mxu0 0
    %566 = vmatpush1.bf16.msra.mxu0 0
    %567 = vmatprep.subr.bf16.mxu0 0
    %568 = vmatpush1.bf16.msra.mxu0 0
    %569 = vmatprep.subr.bf16.mxu0 0
    %570 = vmatpush1.bf16.msra.mxu0 0
    %571 = vmatprep.mubr.bf16.mxu0 0
    %572 = vmatmul.mubr.bf16.gmra.mrb[0].mxu0 %v486
    %v573 = vpop.f32.mrb[0].mxu0
    %v574 = vadd.f32 %v490, %v573
    %v575 = vpop.f32.mrb[0].mxu0
    %v576 = vpop.f32.mrb[0].mxu0
    %v577 = vpop.f32.mrb[0].mxu0
    %578 = vdwg.mxu0
    %v579 = vadd.f32 %v574, %v476
    %580 = vadd.xlane.f32.xlu0 %v579
    %v581 = vpop.xlane.xlu0 %580
    %v582 = vmul.f32 %v581, 0.03125
    %v583 = vsub.f32 %v579, %v582
    %v584 = vsel %vm108, %v583, 0.0
    %v585 = vmul.f32 %v584, %v584
    %586 = vadd.xlane.f32.xlu0 %v585
    %v587 = vpop.xlane.xlu0 %586
    %v588 = vmul.f32 %v587, 0.03125
    %v589 = vadd.f32 %v588, 1e-05
    %v590 = vrsqrt.pop %v589
    %v591 = vmul.f32 %v584, %v590
    %v592 = vlaneseq
    %v593 = vshrl.u32 %v592, 7
    %v594 = vsub.s32 6, %v593
    %v595 = vrot.slane %v109, %v594
    %v596 = vmul.f32 %v591, %v595
    %v597 = vlaneseq
    %v598 = vshrl.u32 %v597, 7
    %v599 = vsub.s32 7, %v598
    %v600 = vrot.slane %v109, %v599
    %v601 = vadd.f32 %v596, %v600
    %s602 = smul.u32 0, 8
    %v603 = vpack.c.bf16 %v355, %v355
    %s604 = sshra.s32 %s602, 3
    %s605 = sand.u32 %s602, 7
    %s606 = smul.addr %s604, 4
    %s607 = scalar_lea.vmem [#allocation2], %s606
    %608 = vst [vmem:[%s607] sm:$0xf] %v603
    %v609 = vpack.c.bf16 %v601, %v601
    %s610 = smul.addr %s604, 4
    %s611 = scalar_lea.vmem [#allocation3], %s610
    %612 = vst [vmem:[%s611] sm:$0xf] %v609
    %p613 = scmp.eq.s32.totalorder 0, 0
    // Predicated region
    $region54: #{tpu_custom_call.1} parent=1 // pred_check
      %p614 = pneg %p613
    $region55: #{tpu_custom_call.1} parent=1 // pred_check_branch
      %616 = sbr.rel (%p614) target = $region57
    $region56: #{tpu_custom_call.1} parent=1 // pred_region
      %v617 = vld [vmem:[#allocation2] sm:$0xf]
      %v618 = vld [vmem:[#allocation3] sm:$0xf]
      %v619 = vlaneseq
      %v620 = vshrl.u32 %v619, 7
      %vm621 = vcmp.lt.s32.totalorder %v620, 8
      %vm622 = vcmp.lt.s32.totalorder %v107, 8
      %vm623 = vmand %vm621, %vm622
      %624 = vmatprep.subr.bf16.mxu0 0
      %625 = vmatpush1.bf16.xpose.msra.mxu0 %v618
      %626 = vmatprep.subr.bf16.mxu0 0
      %627 = vmatpush1.bf16.xpose.msra.mxu0 0
      %628 = vmatprep.subr.bf16.mxu0 0
      %629 = vmatpush1.bf16.xpose.msra.mxu0 0
      %630 = vmatprep.subr.bf16.mxu0 0
      %631 = vmatpush1.bf16.xpose.msra.mxu0 0
      %632 = vmatprep.subr.bf16.mxu0 0
      %633 = vmatpush1.bf16.xpose.msra.mxu0 0
      %634 = vmatprep.subr.bf16.mxu0 0
      %635 = vmatpush1.bf16.xpose.msra.mxu0 0
      %636 = vmatprep.subr.bf16.mxu0 0
      %637 = vmatpush1.bf16.xpose.msra.mxu0 0
      %638 = vmatprep.subr.bf16.mxu0 0
      %639 = vmatpush1.bf16.xpose.msra.mxu0 0
      %640 = vmatprep.subr.bf16.mxu0 0
      %641 = vmatpush1.bf16.xpose.msra.mxu0 0
      %642 = vmatprep.subr.bf16.mxu0 0
      %643 = vmatpush1.bf16.xpose.msra.mxu0 0
      %644 = vmatprep.subr.bf16.mxu0 0
      %645 = vmatpush1.bf16.xpose.msra.mxu0 0
      %646 = vmatprep.subr.bf16.mxu0 0
      %647 = vmatpush1.bf16.xpose.msra.mxu0 0
      %648 = vmatprep.subr.bf16.mxu0 0
      %649 = vmatpush1.bf16.xpose.msra.mxu0 0
      %650 = vmatprep.subr.bf16.mxu0 0
      %651 = vmatpush1.bf16.xpose.msra.mxu0 0
      %652 = vmatprep.subr.bf16.mxu0 0
      %653 = vmatpush1.bf16.xpose.msra.mxu0 0
      %654 = vmatprep.subr.bf16.mxu0 0
      %655 = vmatpush1.bf16.xpose.msra.mxu0 0
      %656 = vmatprep.mubr.bf16.mxu0 0
      %657 = vmatmul.mubr.bf16.gmra.mrb[0].mxu0 %v618
      %v658 = vpop.f32.mrb[0].mxu0
      %v659 = vadd.f32 0.0, %v658
      %v660 = vpop.f32.mrb[0].mxu0
      %v661 = vpop.f32.mrb[0].mxu0
      %v662 = vpop.f32.mrb[0].mxu0
      %663 = vdwg.mxu0
      %664 = vmatprep.subr.bf16.mxu0 0
      %665 = vmatpush1.bf16.xpose.msra.mxu0 %v617
      %666 = vmatprep.subr.bf16.mxu0 0
      %667 = vmatpush1.bf16.xpose.msra.mxu0 0
      %668 = vmatprep.subr.bf16.mxu0 0
      %669 = vmatpush1.bf16.xpose.msra.mxu0 0
      %670 = vmatprep.subr.bf16.mxu0 0
      %671 = vmatpush1.bf16.xpose.msra.mxu0 0
      %672 = vmatprep.subr.bf16.mxu0 0
      %673 = vmatpush1.bf16.xpose.msra.mxu0 0
      %674 = vmatprep.subr.bf16.mxu0 0
      %675 = vmatpush1.bf16.xpose.msra.mxu0 0
      %676 = vmatprep.subr.bf16.mxu0 0
      %677 = vmatpush1.bf16.xpose.msra.mxu0 0
      %678 = vmatprep.subr.bf16.mxu0 0
      %679 = vmatpush1.bf16.xpose.msra.mxu0 0
      %680 = vmatprep.subr.bf16.mxu0 0
      %681 = vmatpush1.bf16.xpose.msra.mxu0 0
      %682 = vmatprep.subr.bf16.mxu0 0
      %683 = vmatpush1.bf16.xpose.msra.mxu0 0
      %684 = vmatprep.subr.bf16.mxu0 0
      %685 = vmatpush1.bf16.xpose.msra.mxu0 0
      %686 = vmatprep.subr.bf16.mxu0 0
      %687 = vmatpush1.bf16.xpose.msra.mxu0 0
      %688 = vmatprep.subr.bf16.mxu0 0
      %689 = vmatpush1.bf16.xpose.msra.mxu0 0
      %690 = vmatprep.subr.bf16.mxu0 0
      %691 = vmatpush1.bf16.xpose.msra.mxu0 0
      %692 = vmatprep.subr.bf16.mxu0 0
      %693 = vmatpush1.bf16.xpose.msra.mxu0 0
      %694 = vmatprep.subr.bf16.mxu0 0
      %695 = vmatpush1.bf16.xpose.msra.mxu0 0
      %696 = vmatprep.mubr.bf16.mxu0 0
      %697 = vmatmul.mubr.bf16.gmra.mrb[0].mxu0 %v617
      %v698 = vpop.f32.mrb[0].mxu0
      %v699 = vadd.f32 %v659, %v698
      %v700 = vpop.f32.mrb[0].mxu0
      %v701 = vpop.f32.mrb[0].mxu0
      %v702 = vpop.f32.mrb[0].mxu0
      %703 = vdwg.mxu0
      %v704 = vmul.f32 %v699, 0.5
      %v705 = vsel %vm623, %v704, -1e+30
      %vm706 = vcmask 64512
      %v707 = vsel %vm706, %v705, -inf
      %708 = vmax.xlane.f32.xlu0 %v707
      %v709 = vpop.xlane.xlu0 %708
      %v710 = vsub.f32 %v705, %v709
      %v711 = vmul.f32 %v710, 1.442695
      %v712 = vpow.pop %v711
      %v713 = vsel %vm706, %v712, 0.0
      %714 = vadd.xlane.f32.xlu0 %v713
      %v715 = vpop.xlane.xlu0 %714
      %v716 = vrcp.pop %v715
      %v717 = vmul.f32 %v712, %v716
      %v718 = vsel %vm623, %v717, 0.0
      %719 = vmatprep.subr.bf16.mxu0 0
      %720 = vmatpush1.bf16.xpose.msra.mxu0 %v617
      %721 = vmatprep.subr.bf16.mxu0 0
      %722 = vmatpush1.bf16.xpose.msra.mxu0 0
      %723 = vmatprep.subr.bf16.mxu0 0
      %724 = vmatpush1.bf16.xpose.msra.mxu0 0
      %725 = vmatprep.subr.bf16.mxu0 0
      %726 = vmatpush1.bf16.xpose.msra.mxu0 0
      %727 = vmatprep.subr.bf16.mxu0 0
      %728 = vmatpush1.bf16.xpose.msra.mxu0 0
      %729 = vmatprep.subr.bf16.mxu0 0
      %730 = vmatpush1.bf16.xpose.msra.mxu0 0
      %731 = vmatprep.subr.bf16.mxu0 0
      %732 = vmatpush1.bf16.xpose.msra.mxu0 0
      %733 = vmatprep.subr.bf16.mxu0 0
      %734 = vmatpush1.bf16.xpose.msra.mxu0 0
      %735 = vmatprep.subr.bf16.mxu0 0
      %736 = vmatpush1.bf16.xpose.msra.mxu0 0
      %737 = vmatprep.subr.bf16.mxu0 0
      %738 = vmatpush1.bf16.xpose.msra.mxu0 0
      %739 = vmatprep.subr.bf16.mxu0 0
      %740 = vmatpush1.bf16.xpose.msra.mxu0 0
      %741 = vmatprep.subr.bf16.mxu0 0
      %742 = vmatpush1.bf16.xpose.msra.mxu0 0
      %743 = vmatprep.subr.bf16.mxu0 0
      %744 = vmatpush1.bf16.xpose.msra.mxu0 0
      %745 = vmatprep.subr.bf16.mxu0 0
      %746 = vmatpush1.bf16.xpose.msra.mxu0 0
      %747 = vmatprep.subr.bf16.mxu0 0
      %748 = vmatpush1.bf16.xpose.msra.mxu0 0
      %749 = vmatprep.subr.bf16.mxu0 0
      %750 = vmatpush1.bf16.xpose.msra.mxu0 0
      %751 = vmatprep.mubr.bf16.mxu0 0
      %752 = vmatmul.mubr.bf16.gmra.mrb[0].mxu0 %v618
      %v753 = vpop.f32.mrb[0].mxu0
      %v754 = vadd.f32 0.0, %v753
      %v755 = vpop.f32.mrb[0].mxu0
      %v756 = vpop.f32.mrb[0].mxu0
      %v757 = vpop.f32.mrb[0].mxu0
      %758 = vdwg.mxu0
      %v759 = vsel %vm623, %v754, -1e+30
      %v760 = vsel %vm706, %v759, -inf
      %761 = vmax.xlane.f32.xlu0 %v760
      %v762 = vpop.xlane.xlu0 %761
      %v763 = vsub.f32 %v759, %v762
      %v764 = vmul.f32 %v763, 1.442695
      %v765 = vpow.pop %v764
      %v766 = vsel %vm706, %v765, 0.0
      %767 = vadd.xlane.f32.xlu0 %v766
      %v768 = vpop.xlane.xlu0 %767
      %v769 = vlog2.pop %v768
      %v770 = vmul.f32 %v769, 0.6931472
      %v771 = vadd.f32 %v770, %v762
      %v772 = vsub.f32 0.0, %v718
      %v773 = vsub.f32 %v759, %v771
      %v774 = vmul.f32 %v772, %v773
      %v775 = vsel %vm706, %v774, 0.0
      %776 = vadd.xlane.f32.xlu0 %v775
      %v777 = vpop.xlane.xlu0 %776
      %v778 = vrot.slane %v760, 4
      %v779 = vmax.f32 %v760, %v778
      %v780 = vrot.slane %v779, 2
      %v781 = vmax.f32 %v779, %v780
      %v782 = vrot.slane %v781, 1
      %v783 = vmax.f32 %v781, %v782
      %v784 = vsub.f32 %v759, %v783
      %v785 = vmul.f32 %v784, 1.442695
      %v786 = vpow.pop %v785
      %v787 = vsel %vm706, %v786, 0.0
      %v788 = vrot.slane %v787, 4
      %v789 = vadd.f32 %v787, %v788
      %v790 = vrot.slane %v789, 2
      %v791 = vadd.f32 %v789, %v790
      %v792 = vrot.slane %v791, 1
      %v793 = vadd.f32 %v791, %v792
      %v794 = vlog2.pop %v793
      %v795 = vmul.f32 %v794, 0.6931472
      %v796 = vadd.f32 %v795, %v783
      %v797 = vsub.f32 %v759, %v796
      %v798 = vmul.f32 %v772, %v797
      %v799 = vsel %vm706, %v798, 0.0
      %v800 = vrot.slane %v799, 4
      %v801 = vadd.f32 %v799, %v800
      %v802 = vrot.slane %v801, 2
      %v803 = vadd.f32 %v801, %v802
      %v804 = vrot.slane %v803, 1
      %v805 = vadd.f32 %v803, %v804
      %v806 = vrot.slane %v777, 4
      %v807 = vadd.f32 %v777, %v806
      %v808 = vrot.slane %v807, 2
      %v809 = vadd.f32 %v807, %v808
      %v810 = vrot.slane %v809, 1
      %v811 = vadd.f32 %v809, %v810
      %v812 = vsel %vm706, %v805, 0.0
      %813 = vadd.xlane.f32.xlu0 %v812
      %v814 = vpop.xlane.xlu0 %813
      %v815 = vadd.f32 %v811, %v814
      %v816 = vmul.f32 %v815, 0.0625
      %817 = vst [vmem:[#allocation15] sm:$0x1] %v816
    $region57: #{tpu_custom_call.1} parent=1 // pred_fallthru
      _
    // Predicated region
    $region58: #{tpu_custom_call.1} parent=1 // pred_check
      _
    $region59: #{tpu_custom_call.1} parent=1 // pred_check_branch
      %819 = sbr.rel (0) target = $region61
    $region60: #{tpu_custom_call.1} parent=1 // pred_region
      %s821 = ssub.s32 16, 16
      %822 = vsyncadd [#allocation6], %s821
      %s824 = sshll.u32 [#allocation15], 4
      %s825 = int_to_ptr.vmem [resolvable:$true] %s824
      %827 = dma.vmem_to_hbm [thread:$0]  %s825, 16, %s7, [#allocation6]
    $region61: #{tpu_custom_call.1} parent=1 // pred_fallthru
      _
    // Predicated region
    $region62: #{tpu_custom_call.1} parent=1 // pred_check
      _
    $region63: #{tpu_custom_call.1} parent=1 // pred_check_branch
      %829 = sbr.rel (0) target = $region65
    $region64: #{tpu_custom_call.1} parent=1 // pred_region
      %830 = dma.done [#allocation6], 16
    $region65: #{tpu_custom_call.1} parent=1 // pred_fallthru
      _
    %831 = vsyncpa [#allocation5], 1
    %832 = vsyncpa [#allocation8], 1
    %833 = vsyncpa [#allocation11], 1
    %834 = vsyncpa [#allocation14], 1
    %835 = vsyncpa [#allocation6], 1

</llo_original>
